<compile_context>
chip_gen: v6e
topology: v6e:2x2x1
jax: 0.10.0
libtpu: 0.0.40
codegen_flags: <defaults>
</compile_context>

<pallas_src>
import math
from functools import partial

import numpy as np
import jax
import jax.numpy as jnp
from jax.experimental import pallas as pl
from jax.experimental.pallas import tpu as pltpu

LANES = 128


def _round_up(x, m):
    return ((x + m - 1) // m) * m


# ----------------------------- schedule (glue) -----------------------------

def cosine_beta_schedule_np(timesteps, s=0.008):
    steps = timesteps + 1
    x = np.linspace(0, timesteps, steps, dtype=np.float64)
    alphas_cumprod = np.cos((x / timesteps + s) / (1 + s) * math.pi * 0.5) ** 2
    alphas_cumprod = alphas_cumprod / alphas_cumprod[0]
    betas = 1.0 - alphas_cumprod[1:] / alphas_cumprod[:-1]
    return np.clip(betas, 0.0, 0.999)


def build_buffers(timesteps):
    betas = cosine_beta_schedule_np(timesteps)
    alphas = 1.0 - betas
    alphas_cumprod = np.cumprod(alphas, axis=0)
    bufs = dict(
        sqrt_alphas_cumprod=np.sqrt(alphas_cumprod),
        sqrt_one_minus_alphas_cumprod=np.sqrt(1.0 - alphas_cumprod),
        sqrt_recip_alphas_cumprod=np.sqrt(1.0 / alphas_cumprod),
        sqrt_recipm1_alphas_cumprod=np.sqrt(1.0 / alphas_cumprod - 1.0),
    )
    return {k: jnp.asarray(v, dtype=jnp.float32) for k, v in bufs.items()}


def sinusoidal_time_emb(t, dim):
    half = dim // 2
    freqs = jnp.exp(-math.log(10000.0) * jnp.arange(half, dtype=jnp.float32) /
                    jnp.maximum(half - 1, 1))
    args = t.astype(jnp.float32)[:, None] * freqs[None, :]
    return jnp.concatenate([jnp.sin(args), jnp.cos(args)], axis=-1)


# ------------------------------ Pallas kernel -------------------------------

def p_losses_kernel(a_ref, coef_ref, w_ref, b_ref, out_ref, *, d):
    # a_ref    : (TB, 128) f32  = [x_start | noise | t_emb | ctx]   (lane-dense)
    # coef_ref : (TB, 4)   f32  = [sqrt_ac, sqrt_1m_ac, sqrt_recip_ac, sqrt_recipm1_ac]
    # w_ref    : (2, 128, 128) bf16 = [fused W1 (x-rows duplicated at noise rows) ; padded W2]
    # b_ref    : (2, 128)  f32      = [padded b1 ; padded b2]       (resident)
    # out_ref  : (1, 1, 128) f32     per-tile per-lane partial L1 sums
    a = a_ref[...]
    sa, soma = coef_ref[:, 0:1], coef_ref[:, 1:2]
    sra, srm1 = coef_ref[:, 2:3], coef_ref[:, 3:4]

    lane = jax.lax.broadcasted_iota(jnp.int32, (1, LANES), 1)
    in_x = lane < d
    in_noise = (lane >= d) & (lane < 2 * d)

    # per-lane scaling: [sa*x | soma*noise | t_emb | ctx]  (f32, VPU)
    scale = jnp.where(in_x, sa, jnp.where(in_noise, soma, 1.0))
    op = scale * a

    # q_sample (x_t) on the x lanes: sa*x + soma*noise.  One XLU lane-roll
    # brings the noise lanes onto the x lanes; other lanes are don't-care.
    x_t = op + pltpu.roll(op, shift=LANES - d, axis=1)

    # --- synthetic denoiser: one fused K=128 matmul + one H=128 matmul.
    # The duplicated x-rows in W1 make the MXU compute q_sample(x)@Wx directly
    # from the unshifted operand.  bf16 operands, f32 accumulation.
    h = jnp.dot(op.astype(jnp.bfloat16), w_ref[0],
                preferred_element_type=jnp.float32) + b_ref[0:1, :]
    h = jax.nn.gelu(h)
    pred_noise = jnp.dot(h.astype(jnp.bfloat16), w_ref[1],
                         preferred_element_type=jnp.float32) + b_ref[1:2, :]
    # pred_noise lanes >= d are exactly zero (zero-padded W2 columns / b2).

    # --- predict_start_from_noise (objective='pred_noise'), f32 ---
    pred_x_start = sra * x_t - srm1 * pred_noise

    # --- L1 vs x_start (x lanes of `a`): per-lane partial sums only.
    # Padded lanes are masked; zero-coef padded rows contribute exactly zero.
    diff = jnp.where(in_x, jnp.abs(pred_x_start - a), 0.0)
    out_ref[...] = jnp.sum(diff, axis=0, keepdims=True)[None]


# ------------------------------- wrapper -------------------------------------

class GaussianDiffusionPallas:
    def __init__(self, latent_dim=32, context_dim=32, hidden_dim=128,
                 time_dim=32, timesteps=1000, class_unconditional_prob=0.1,
                 tile_rows=1024, seed=0):
        assert 2 * latent_dim + time_dim + context_dim <= LANES
        assert hidden_dim <= LANES and latent_dim <= LANES
        self.latent_dim = latent_dim
        self.context_dim = context_dim
        self.hidden_dim = hidden_dim
        self.time_dim = time_dim
        self.num_timesteps = timesteps
        self.class_unconditional_prob = class_unconditional_prob
        self.tile_rows = tile_rows
        self.buffers = build_buffers(timesteps)

        # deterministic synthetic denoiser parameters (unfused, f32)
        k = jax.random.PRNGKey(seed)
        ks = jax.random.split(k, 7)
        s = 0.02
        self.wx = s * jax.random.normal(ks[0], (latent_dim, hidden_dim), jnp.float32)
        self.wt = s * jax.random.normal(ks[1], (time_dim, hidden_dim), jnp.float32)
        self.wc = s * jax.random.normal(ks[2], (context_dim, hidden_dim), jnp.float32)
        self.b1 = s * jax.random.normal(ks[3], (1, hidden_dim), jnp.float32)
        self.w2 = s * jax.random.normal(ks[4], (hidden_dim, latent_dim), jnp.float32)
        self.b2 = s * jax.random.normal(ks[5], (1, latent_dim), jnp.float32)
        self.null_emb = s * jax.random.normal(ks[6], (1, context_dim), jnp.float32)

        # fused / zero-padded parameters for the kernel.  W1 row layout matches
        # the packed stream [x | noise | t_emb | ctx]; the x-weight block is
        # duplicated at the noise rows so the MXU folds q_sample's linear mix.
        d, dt, c, h = latent_dim, time_dim, context_dim, hidden_dim
        w1p = jnp.zeros((LANES, LANES), jnp.float32)
        w1p = w1p.at[0:d, 0:h].set(self.wx)
        w1p = w1p.at[d:2 * d, 0:h].set(self.wx)                 # noise rows = Wx
        w1p = w1p.at[2 * d:2 * d + dt, 0:h].set(self.wt)
        w1p = w1p.at[2 * d + dt:2 * d + dt + c, 0:h].set(self.wc)
        w2p = jnp.zeros((LANES, LANES), jnp.float32).at[0:h, 0:d].set(self.w2)
        self.W = jnp.stack([w1p, w2p]).astype(jnp.bfloat16)     # (2,128,128) bf16
        b1p = jnp.zeros((LANES,), jnp.float32).at[0:h].set(self.b1[0])
        b2p = jnp.zeros((LANES,), jnp.float32).at[0:d].set(self.b2[0])
        self.Bias = jnp.stack([b1p, b2p])                       # (2,128) f32

    # randomness + tiny "extract"/embedding glue, shared by kernel & reference
    def _prepare(self, txt_latent, context, key):
        b = txt_latent.shape[0]
        k_t, k_noise, k_bern = jax.random.split(key, 3)
        t = jax.random.randint(k_t, (b,), 0, self.num_timesteps)
        noise = jax.random.normal(k_noise, txt_latent.shape, jnp.float32)
        # classifier-free dropout: replace context rows with the null embedding
        uncond = jax.random.bernoulli(k_bern, self.class_unconditional_prob, (b,))
        ctx_m = jnp.where(uncond[:, None], self.null_emb, context)
        temb = sinusoidal_time_emb(t, self.time_dim)
        coefs = jnp.stack([
            self.buffers['sqrt_alphas_cumprod'][t],
            self.buffers['sqrt_one_minus_alphas_cumprod'][t],
            self.buffers['sqrt_recip_alphas_cumprod'][t],
            self.buffers['sqrt_recipm1_alphas_cumprod'][t],
        ], axis=-1).astype(jnp.float32)
        return noise, temb, ctx_m, coefs

    def forward(self, txt_latent, context, mask, key):
        # TODO(synk): `mask` (sequence mask) is unused — the stand-in denoiser
        # operates on the flat (B, D) latent implied by forward()'s unpacking.
        del mask
        b, d = txt_latent.shape
        dt, c = self.time_dim, self.context_dim
        noise, temb, ctx_m, coefs = self._prepare(txt_latent, context, key)

        tb = min(self.tile_rows, _round_up(b, 8))
        b_pad = _round_up(b, tb)
        num_tiles = b_pad // tb

        # single lane-dense per-sample stream [x | noise | t_emb | ctx]
        a = jnp.zeros((b_pad, LANES), jnp.float32)
        a = a.at[:b, 0:d].set(txt_latent)
        a = a.at[:b, d:2 * d].set(noise)
        a = a.at[:b, 2 * d:2 * d + dt].set(temb)
        a = a.at[:b, 2 * d + dt:2 * d + dt + c].set(ctx_m)
        coefs_p = jnp.zeros((b_pad, 4), jnp.float32).at[:b].set(coefs)
        # zero coefs in padded rows force their loss contribution to exactly 0

        kernel = partial(p_losses_kernel, d=d)
        partials = pl.pallas_call(
            kernel,
            out_shape=jax.ShapeDtypeStruct((num_tiles, 1, LANES), jnp.float32),
            grid=(num_tiles,),
            in_specs=[
                pl.BlockSpec((tb, LANES), lambda i: (i, 0)),
                pl.BlockSpec((tb, 4), lambda i: (i, 0)),
                pl.BlockSpec((2, LANES, LANES), lambda i: (0, 0, 0)),  # resident
                pl.BlockSpec((2, LANES), lambda i: (0, 0)),            # resident
            ],
            out_specs=pl.BlockSpec((1, 1, LANES), lambda i: (i, 0, 0)),
            compiler_params=pltpu.CompilerParams(
                dimension_semantics=("parallel",)),
        )(a, coefs_p, self.W, self.Bias)

        # final cross-lane reduce; mean folded into a constant multiply,
        # divisor uses the true (unpadded) element count b*d.
        return jnp.sum(partials) * (1.0 / (b * d))

    def reference_forward(self, txt_latent, context, mask, key):
        """Pure-JAX mirror of forward() (same RNG, same bf16 cast points)."""
        del mask
        noise, temb, ctx_m, coefs = self._prepare(txt_latent, context, key)
        sa, soma = coefs[:, 0:1], coefs[:, 1:2]
        sra, srm1 = coefs[:, 2:3], coefs[:, 3:4]
        bf = jnp.bfloat16
        dot = partial(jnp.dot, preferred_element_type=jnp.float32)
        x_t = sa * txt_latent + soma * noise
        # kernel casts sa*x and soma*noise to bf16 separately (MXU f32 acc)
        h = (dot((sa * txt_latent).astype(bf), self.wx.astype(bf))
             + dot((soma * noise).astype(bf), self.wx.astype(bf))
             + dot(temb.astype(bf), self.wt.astype(bf))
             + dot(ctx_m.astype(bf), self.wc.astype(bf))
             + self.b1)
        h = jax.nn.gelu(h)
        pred_noise = dot(h.astype(bf), self.w2.astype(bf)) + self.b2
        pred_x_start = sra * x_t - srm1 * pred_noise
        return jnp.mean(jnp.abs(pred_x_start - txt_latent))


# --------------------------------- demo ---------------------------------------

if __name__ == "__main__":
    B, D, C = 20, 32, 32          # B not a multiple of the tile -> exercises padding
    key = jax.random.PRNGKey(0)
    k_x, k_c, k_fwd = jax.random.split(key, 3)

    txt_latent = jax.random.normal(k_x, (B, D), jnp.float32)
    context = jax.random.normal(k_c, (B, C), jnp.float32)
    mask = jnp.ones((B,), jnp.bool_)

    # tile_rows=8 at this tiny batch -> 3 grid steps, exercising the tiled path.
    gd = GaussianDiffusionPallas(latent_dim=D, context_dim=C, hidden_dim=128,
                                 time_dim=32, timesteps=1000, tile_rows=8, seed=0)
    loss = jax.block_until_ready(gd.forward(txt_latent, context, mask, k_fwd))
    assert loss.shape == () and bool(jnp.isfinite(loss))

    # Pure-JAX reference with identical RNG and bf16 matmul precision:
    # catches any packing / lane-layout / coefficient bug in the kernel path.
    loss_ref = jax.block_until_ready(
        gd.reference_forward(txt_latent, context, mask, k_fwd))
    assert abs(float(loss) - float(loss_ref)) <= 1e-3 + 1e-3 * abs(float(loss_ref)), \
        (float(loss), float(loss_ref))

    print("KERNEL_OK")
</pallas_src>

<mosaic_0001>
module attributes {stable_mosaic.version = 11 : i64} {
  func.func @p_losses_kernel(%arg0: i32, %arg1: memref<8x128xf32, #tpu.memory_space<vmem>>, %arg2: memref<8x4xf32, #tpu.memory_space<vmem>>, %arg3: memref<2x128x128xbf16, #tpu.memory_space<vmem>>, %arg4: memref<2x128xf32, #tpu.memory_space<vmem>>, %arg5: memref<1x1x128xf32, #tpu.memory_space<vmem>>) attributes {dimension_semantics = [#tpu.dimension_semantics<parallel>], iteration_bounds = array<i64: 3>, scalar_prefetch = 0 : i64, scratch_operands = 0 : i64, tpu.core_type = #tpu.core_type<tc>, window_params = [{transform_indices = @transform_0, window_bounds = array<i64: 8, 128>}, {transform_indices = @transform_1, window_bounds = array<i64: 8, 4>}, {pipeline_mode = #tpu.pipeline_mode<synchronous>, transform_indices = @transform_2, window_bounds = array<i64: 2, 128, 128>}, {pipeline_mode = #tpu.pipeline_mode<synchronous>, transform_indices = @transform_3, window_bounds = array<i64: 2, 128>}, {transform_indices = @transform_4, window_bounds = array<i64: 1, 1, 128>}]} {
    %c0 = arith.constant 0 : index
    %c0_0 = arith.constant 0 : index
    %0 = vector.load %arg1[%c0, %c0_0] : memref<8x128xf32, #tpu.memory_space<vmem>>, vector<8x128xf32>
    %c0_1 = arith.constant 0 : index
    %c0_2 = arith.constant 0 : index
    %1 = vector.load %arg2[%c0_1, %c0_2] : memref<8x4xf32, #tpu.memory_space<vmem>>, vector<8x1xf32>
    %c0_3 = arith.constant 0 : index
    %c1 = arith.constant 1 : index
    %2 = vector.load %arg2[%c0_3, %c1] : memref<8x4xf32, #tpu.memory_space<vmem>>, vector<8x1xf32>
    %c0_4 = arith.constant 0 : index
    %c2 = arith.constant 2 : index
    %3 = vector.load %arg2[%c0_4, %c2] : memref<8x4xf32, #tpu.memory_space<vmem>>, vector<8x1xf32>
    %c0_5 = arith.constant 0 : index
    %c3 = arith.constant 3 : index
    %4 = vector.load %arg2[%c0_5, %c3] : memref<8x4xf32, #tpu.memory_space<vmem>>, vector<8x1xf32>
    %5 = tpu.iota {dimensions = array<i32: 1>} : vector<1x128xi32>
    %c32_i32 = arith.constant 32 : i32
    %6 = vector.broadcast %c32_i32 : i32 to vector<1x128xi32>
    %7 = arith.cmpi slt, %5, %6 : vector<1x128xi32>
    %c32_i32_6 = arith.constant 32 : i32
    %8 = vector.broadcast %c32_i32_6 : i32 to vector<1x128xi32>
    %9 = arith.cmpi sge, %5, %8 : vector<1x128xi32>
    %c64_i32 = arith.constant 64 : i32
    %10 = vector.broadcast %c64_i32 : i32 to vector<1x128xi32>
    %11 = arith.cmpi slt, %5, %10 : vector<1x128xi32>
    %12 = arith.andi %9, %11 : vector<1x128xi1>
    %cst = arith.constant 1.000000e+00 : f32
    %13 = vector.shape_cast %12 : vector<1x128xi1> to vector<1x128xi1>
    %14 = vector.broadcast %13 : vector<1x128xi1> to vector<8x128xi1>
    %15 = vector.shape_cast %2 : vector<8x1xf32> to vector<8x1xf32>
    %16 = vector.broadcast %15 : vector<8x1xf32> to vector<8x128xf32>
    %17 = vector.broadcast %cst : f32 to vector<8x128xf32>
    %18 = arith.select %14, %16, %17 : vector<8x128xi1>, vector<8x128xf32>
    %19 = vector.shape_cast %7 : vector<1x128xi1> to vector<1x128xi1>
    %20 = vector.broadcast %19 : vector<1x128xi1> to vector<8x128xi1>
    %21 = vector.shape_cast %1 : vector<8x1xf32> to vector<8x1xf32>
    %22 = vector.broadcast %21 : vector<8x1xf32> to vector<8x128xf32>
    %23 = arith.select %20, %22, %18 : vector<8x128xi1>, vector<8x128xf32>
    %24 = arith.mulf %23, %0 : vector<8x128xf32>
    %c96_i32 = arith.constant 96 : i32
    %25 = tpu.dynamic_rotate %24 by %c96_i32 dim 1 : vector<8x128xf32>, i32 -> vector<8x128xf32>
    %26 = arith.addf %24, %25 : vector<8x128xf32>
    %27 = arith.truncf %24 : vector<8x128xf32> to vector<8x128xbf16>
    %c0_7 = arith.constant 0 : index
    %c0_8 = arith.constant 0 : index
    %c0_9 = arith.constant 0 : index
    %28 = vector.load %arg3[%c0_7, %c0_8, %c0_9] : memref<2x128x128xbf16, #tpu.memory_space<vmem>>, vector<1x128x128xbf16>
    %29 = vector.shape_cast %28 : vector<1x128x128xbf16> to vector<128x128xbf16>
    %cst_10 = arith.constant dense<0.000000e+00> : vector<8x128xf32>
    %30 = tpu.matmul %27, %29, %cst_10 {dimension_numbers = #tpu.dot_dimension_numbers<[1], [0], [0], [1], [0, 0, 1, 1], [], []>} : vector<8x128xbf16>, vector<128x128xbf16>, vector<8x128xf32> -> vector<8x128xf32>
    %c0_11 = arith.constant 0 : index
    %c0_12 = arith.constant 0 : index
    %31 = vector.load %arg4[%c0_11, %c0_12] : memref<2x128xf32, #tpu.memory_space<vmem>>, vector<1x128xf32>
    %32 = vector.broadcast %31 : vector<1x128xf32> to vector<8x128xf32>
    %33 = arith.addf %30, %32 : vector<8x128xf32>
    %34 = arith.mulf %33, %33 : vector<8x128xf32>
    %35 = arith.mulf %33, %34 : vector<8x128xf32>
    %cst_13 = arith.constant 4.471500e-02 : f32
    %36 = vector.broadcast %cst_13 : f32 to vector<8x128xf32>
    %37 = arith.mulf %36, %35 : vector<8x128xf32>
    %38 = arith.addf %33, %37 : vector<8x128xf32>
    %cst_14 = arith.constant 0.797884583 : f32
    %39 = vector.broadcast %cst_14 : f32 to vector<8x128xf32>
    %40 = arith.mulf %39, %38 : vector<8x128xf32>
    %41 = math.tanh %40 : vector<8x128xf32>
    %cst_15 = arith.constant 1.000000e+00 : f32
    %42 = vector.broadcast %cst_15 : f32 to vector<8x128xf32>
    %43 = arith.addf %42, %41 : vector<8x128xf32>
    %cst_16 = arith.constant 5.000000e-01 : f32
    %44 = vector.broadcast %cst_16 : f32 to vector<8x128xf32>
    %45 = arith.mulf %44, %43 : vector<8x128xf32>
    %46 = arith.mulf %33, %45 : vector<8x128xf32>
    %47 = arith.truncf %46 : vector<8x128xf32> to vector<8x128xbf16>
    %c1_17 = arith.constant 1 : index
    %c0_18 = arith.constant 0 : index
    %c0_19 = arith.constant 0 : index
    %48 = vector.load %arg3[%c1_17, %c0_18, %c0_19] : memref<2x128x128xbf16, #tpu.memory_space<vmem>>, vector<1x128x128xbf16>
    %49 = vector.shape_cast %48 : vector<1x128x128xbf16> to vector<128x128xbf16>
    %cst_20 = arith.constant dense<0.000000e+00> : vector<8x128xf32>
    %50 = tpu.matmul %47, %49, %cst_20 {dimension_numbers = #tpu.dot_dimension_numbers<[1], [0], [0], [1], [0, 0, 1, 1], [], []>} : vector<8x128xbf16>, vector<128x128xbf16>, vector<8x128xf32> -> vector<8x128xf32>
    %c1_21 = arith.constant 1 : index
    %c0_22 = arith.constant 0 : index
    %51 = vector.load %arg4[%c1_21, %c0_22] : memref<2x128xf32, #tpu.memory_space<vmem>>, vector<1x128xf32>
    %52 = vector.broadcast %51 : vector<1x128xf32> to vector<8x128xf32>
    %53 = arith.addf %50, %52 : vector<8x128xf32>
    %54 = vector.broadcast %3 : vector<8x1xf32> to vector<8x128xf32>
    %55 = arith.mulf %54, %26 : vector<8x128xf32>
    %56 = vector.broadcast %4 : vector<8x1xf32> to vector<8x128xf32>
    %57 = arith.mulf %56, %53 : vector<8x128xf32>
    %58 = arith.subf %55, %57 : vector<8x128xf32>
    %59 = arith.subf %58, %0 : vector<8x128xf32>
    %60 = math.absf %59 : vector<8x128xf32>
    %cst_23 = arith.constant 0.000000e+00 : f32
    %61 = vector.shape_cast %7 : vector<1x128xi1> to vector<1x128xi1>
    %62 = vector.broadcast %61 : vector<1x128xi1> to vector<8x128xi1>
    %63 = vector.broadcast %cst_23 : f32 to vector<8x128xf32>
    %64 = arith.select %62, %60, %63 : vector<8x128xi1>, vector<8x128xf32>
    %cst_24 = arith.constant dense<0.000000e+00> : vector<128xf32>
    %65 = vector.multi_reduction <add>, %64, %cst_24 [0] : vector<8x128xf32> to vector<128xf32>
    %66 = vector.shape_cast %65 : vector<128xf32> to vector<1x128xf32>
    %67 = vector.shape_cast %66 : vector<1x128xf32> to vector<1x1x128xf32>
    %c0_25 = arith.constant 0 : index
    %c0_26 = arith.constant 0 : index
    %c0_27 = arith.constant 0 : index
    %68 = vector.load %arg5[%c0_25, %c0_26, %c0_27] : memref<1x1x128xf32, #tpu.memory_space<vmem>>, vector<1x1x128xf32>
    tpu.vector_store %arg5[%c0_25, %c0_26, %c0_27], %67 {strides = array<i32>} : memref<1x1x128xf32, #tpu.memory_space<vmem>>, vector<1x1x128xf32>,
    return
  }
  func.func @transform_0(%arg0: i32) -> (i32, i32) {
    %c0_i32 = arith.constant 0 : i32
    %c0_i32_0 = arith.constant 0 : i32
    return %arg0, %c0_i32 : i32, i32
  }
  func.func @transform_1(%arg0: i32) -> (i32, i32) {
    %c0_i32 = arith.constant 0 : i32
    %c0_i32_0 = arith.constant 0 : i32
    return %arg0, %c0_i32 : i32, i32
  }
  func.func @transform_2(%arg0: i32) -> (i32, i32, i32) {
    %c0_i32 = arith.constant 0 : i32
    %c0_i32_0 = arith.constant 0 : i32
    %c0_i32_1 = arith.constant 0 : i32
    %c0_i32_2 = arith.constant 0 : i32
    return %c0_i32, %c0_i32_0, %c0_i32_1 : i32, i32, i32
  }
  func.func @transform_3(%arg0: i32) -> (i32, i32) {
    %c0_i32 = arith.constant 0 : i32
    %c0_i32_0 = arith.constant 0 : i32
    %c0_i32_1 = arith.constant 0 : i32
    return %c0_i32, %c0_i32_0 : i32, i32
  }
  func.func @transform_4(%arg0: i32) -> (i32, i32, i32) {
    %c0_i32 = arith.constant 0 : i32
    %c0_i32_0 = arith.constant 0 : i32
    %c0_i32_1 = arith.constant 0 : i32
    return %arg0, %c0_i32, %c0_i32_0 : i32, i32, i32
  }
}

</mosaic_0001>

<llo_original>
// kernel: tpu_custom_call.1
$region0: #{tpu_custom_call.1}
  #allocation0 [shape = 'u32[]', space=smem, size = 0x4, offset = 0x4, fixed_abs, tag = 'smem constant byte address 0x4 - core index']
  #allocation1 [shape = 'u32[144,128]{1,0:T(1,128)}', space=vmem, size = 0x12000, scoped, tag = 'internal scratch']
  %s0 = inlined_call_operand.vmem [shape: f32[24,128], index: 0, kind: input, shape index: {}]
  %s1 = inlined_call_operand.vmem [shape: f32[24,4], index: 1, kind: input, shape index: {}]
  %s2 = inlined_call_operand.hbm [shape: bf16[2,128,128], index: 2, kind: input, shape index: {}]
  %s3 = inlined_call_operand.vmem [shape: f32[2,128], index: 3, kind: input, shape index: {}]
  %s4 = inlined_call_operand.hbm [shape: f32[3,1,128], index: 4, kind: output, shape index: {}]
  %s5 = sld [smem:[#allocation0]]
  $region53: #{tpu_custom_call.1} parent=0
    _
  %s7 = ssub.s32 1, %s5
  %s8 = scalar_select 0, %s7, %s5
  $region1: #{tpu_custom_call.1} parent=0
    #allocation2 [shape = 'u8[65536]{0}', space=vmem, size = 0x10000, scoped, tag = 'input window, operand 2, single buffered']
    #allocation3 [shape = 's32[2]{0}', space=sflag, size = 0x8, scoped, tag = 'scoped memory for tpu_custom_call.1']
    #allocation4 [shape = 's32[2]{0}', space=sflag, size = 0x8, scoped, tag = 'scoped memory for tpu_custom_call.1']
    #allocation5 [shape = 'u8[1024]{0}', space=vmem, size = 0x400, scoped, tag = 'output window, operand 0']
    %9 = vsyncpa [#allocation3], 0
    %10 = vsyncpa [#allocation4], 0
    %s11 = scalar_lea.sflag [#allocation4], 1
    %12 = vsyncpa %s11, 0
    loop: start=0, step=1, limit=5
    $region2: #{tpu_custom_call.1} parent=1 // loop_pre_header
      _
    $region3: #{tpu_custom_call.1} parent=1 // loop_header
      %s14 = sphi 0, %s18
      %p15 = scmp.ge.s32.totalorder %s14, 5
      %s24 = sphi 0, %s26
      %s27 = sphi 0, %s24
      %s28 = sphi 0, %s27
      %s44 = sphi 0, %s28
      %s50 = sphi 0, %s52
      %s53 = sphi 0, %s50
      %s54 = sphi 0, %s53
      %s70 = sphi 0, %s54
      %s74 = sphi 0, %s74
      %s76 = sphi 0, %s74
      %s77 = sphi 0, %s76
      %s91 = sphi 0, %s77
      %s95 = sphi 0, %s95
      %s97 = sphi 0, %s95
      %s98 = sphi 0, %s97
      %s112 = sphi 0, %s98
      %s118 = sphi 0, %s120
      %s121 = sphi 0, %s118
      %s122 = sphi 0, %s121
      %s138 = sphi 0, %s122
    $region4: #{tpu_custom_call.1} parent=1 // loop_header_branch
      %17 = sbr.rel (%p15) target = $region8
    $region5: #{tpu_custom_call.1} parent=1 // loop_body
      %s19 = ssub.s32 %s14, 1
      %s20 = ssub.s32 %s14, 2
      %s21 = sadd.s32 %s14, 1
      %s22 = ssub.s32 %s14, %s21
      %p23 = scmp.eq.s32.totalorder %s22, 0
      %s25 = sadd.s32 %s24, 1
      %s26 = scalar_select %p23, %s24, %s25
      %p29 = pneg %p23
      %p30 = scmp.eq.s32.totalorder %s14, 2
      %p31 = por %p29, %p30
      %p32 = scmp.ne.s32.totalorder %s24, %s27
      %p33 = scmp.eq.s32.totalorder %s14, 0
      %p34 = por %p32, %p33
      %p35 = scmp.ne.s32.totalorder %s24, %s27
      %p36 = scmp.eq.s32.totalorder %s19, 2
      %p37 = por %p35, %p36
      %p38 = scmp.ne.s32.totalorder %s27, %s28
      %p39 = scmp.eq.s32.totalorder %s19, 0
      %p40 = por %p38, %p39
      %p41 = scmp.ne.s32.totalorder %s27, %s28
      %p42 = scmp.eq.s32.totalorder %s20, 2
      %p43 = por %p41, %p42
      %p45 = scmp.ne.s32.totalorder %s28, %s44
      %p46 = scmp.eq.s32.totalorder %s20, 0
      %p47 = por %p45, %p46
      %s48 = ssub.s32 %s14, %s21
      %p49 = scmp.eq.s32.totalorder %s48, 0
      %s51 = sadd.s32 %s50, 1
      %s52 = scalar_select %p49, %s50, %s51
      %p55 = pneg %p49
      %p56 = scmp.eq.s32.totalorder %s14, 2
      %p57 = por %p55, %p56
      %p58 = scmp.ne.s32.totalorder %s50, %s53
      %p59 = scmp.eq.s32.totalorder %s14, 0
      %p60 = por %p58, %p59
      %p61 = scmp.ne.s32.totalorder %s50, %s53
      %p62 = scmp.eq.s32.totalorder %s19, 2
      %p63 = por %p61, %p62
      %p64 = scmp.ne.s32.totalorder %s53, %s54
      %p65 = scmp.eq.s32.totalorder %s19, 0
      %p66 = por %p64, %p65
      %p67 = scmp.ne.s32.totalorder %s53, %s54
      %p68 = scmp.eq.s32.totalorder %s20, 2
      %p69 = por %p67, %p68
      %p71 = scmp.ne.s32.totalorder %s54, %s70
      %p72 = scmp.eq.s32.totalorder %s20, 0
      %p73 = por %p71, %p72
      %s75 = sadd.s32 %s74, 1
      %p78 = scmp.eq.s32.totalorder %s14, 2
      %p79 = scmp.ne.s32.totalorder %s74, %s76
      %p80 = scmp.eq.s32.totalorder %s14, 0
      %p81 = por %p79, %p80
      %p82 = scmp.ne.s32.totalorder %s74, %s76
      %p83 = scmp.eq.s32.totalorder %s19, 2
      %p84 = por %p82, %p83
      %p85 = scmp.ne.s32.totalorder %s76, %s77
      %p86 = scmp.eq.s32.totalorder %s19, 0
      %p87 = por %p85, %p86
      %p88 = scmp.ne.s32.totalorder %s76, %s77
      %p89 = scmp.eq.s32.totalorder %s20, 2
      %p90 = por %p88, %p89
      %p92 = scmp.ne.s32.totalorder %s77, %s91
      %p93 = scmp.eq.s32.totalorder %s20, 0
      %p94 = por %p92, %p93
      %s96 = sadd.s32 %s95, 1
      %p99 = scmp.eq.s32.totalorder %s14, 2
      %p100 = scmp.ne.s32.totalorder %s95, %s97
      %p101 = scmp.eq.s32.totalorder %s14, 0
      %p102 = por %p100, %p101
      %p103 = scmp.ne.s32.totalorder %s95, %s97
      %p104 = scmp.eq.s32.totalorder %s19, 2
      %p105 = por %p103, %p104
      %p106 = scmp.ne.s32.totalorder %s97, %s98
      %p107 = scmp.eq.s32.totalorder %s19, 0
      %p108 = por %p106, %p107
      %p109 = scmp.ne.s32.totalorder %s97, %s98
      %p110 = scmp.eq.s32.totalorder %s20, 2
      %p111 = por %p109, %p110
      %p113 = scmp.ne.s32.totalorder %s98, %s112
      %p114 = scmp.eq.s32.totalorder %s20, 0
      %p115 = por %p113, %p114
      %s116 = ssub.s32 %s14, %s21
      %p117 = scmp.eq.s32.totalorder %s116, 0
      %s119 = sadd.s32 %s118, 1
      %s120 = scalar_select %p117, %s118, %s119
      %p123 = pneg %p117
      %p124 = scmp.eq.s32.totalorder %s14, 2
      %p125 = por %p123, %p124
      %p126 = scmp.ne.s32.totalorder %s118, %s121
      %p127 = scmp.eq.s32.totalorder %s14, 0
      %p128 = por %p126, %p127
      %p129 = scmp.ne.s32.totalorder %s118, %s121
      %p130 = scmp.eq.s32.totalorder %s19, 2
      %p131 = por %p129, %p130
      %p132 = scmp.ne.s32.totalorder %s121, %s122
      %p133 = scmp.eq.s32.totalorder %s19, 0
      %p134 = por %p132, %p133
      %p135 = scmp.ne.s32.totalorder %s121, %s122
      %p136 = scmp.eq.s32.totalorder %s20, 2
      %p137 = por %p135, %p136
      %p139 = scmp.ne.s32.totalorder %s122, %s138
      %p140 = scmp.eq.s32.totalorder %s20, 0
      %p141 = por %p139, %p140
      %p142 = scmp.le.s32.totalorder 1, %s14
      %p143 = scmp.lt.s32.totalorder %s14, 4
      %p144 = pnand %p142, %p143
      %p145 = pneg %p144
      // Predicated region
      $region9: #{tpu_custom_call.1} parent=5 // pred_check
        _
      $region10: #{tpu_custom_call.1} parent=5 // pred_check_branch
        %147 = sbr.rel (%p144) target = $region12
      $region11: #{tpu_custom_call.1} parent=5 // pred_region
        %s148 = ssub.s32 %s14, 1
        // Predicated region
        $region13: #{tpu_custom_call.1} parent=11 // pred_check
          %p149 = pneg %p87
        $region14: #{tpu_custom_call.1} parent=11 // pred_check_branch
          %151 = sbr.rel (%p149) target = $region16
        $region15: #{tpu_custom_call.1} parent=11 // pred_region
          %s153 = ssub.s32 2048, 2048
          %154 = vsyncadd [#allocation3], %s153
          %s155 = sshll.u32 [#allocation2], 4
          %s156 = int_to_ptr.vmem [resolvable:$true] %s155
          %161 = dma.hbm_to_vmem [thread:$0]  %s2, 2048, %s156, [#allocation3], 64, 64, 4
        $region16: #{tpu_custom_call.1} parent=11 // pred_fallthru
          _
        // Predicated region
        $region17: #{tpu_custom_call.1} parent=11 // pred_check
          %p162 = pneg %p108
        $region18: #{tpu_custom_call.1} parent=11 // pred_check_branch
          %164 = sbr.rel (%p162) target = $region20
        $region19: #{tpu_custom_call.1} parent=11 // pred_region
          _
        $region20: #{tpu_custom_call.1} parent=11 // pred_fallthru
          _
      $region12: #{tpu_custom_call.1} parent=5 // pred_fallthru
        _
      %p165 = scmp.lt.s32.totalorder %s14, 3
      // Predicated region
      $region21: #{tpu_custom_call.1} parent=5 // pred_check
        %p166 = pneg %p165
      $region22: #{tpu_custom_call.1} parent=5 // pred_check_branch
        %168 = sbr.rel (%p166) target = $region24
      $region23: #{tpu_custom_call.1} parent=5 // pred_region
        // Predicated region
        $region25: #{tpu_custom_call.1} parent=23 // pred_check
          %p169 = pneg %p34
        $region26: #{tpu_custom_call.1} parent=23 // pred_check_branch
          %171 = sbr.rel (%p169) target = $region28
        $region27: #{tpu_custom_call.1} parent=23 // pred_region
          %p172 = scmp.lt.s32.totalorder %s14, 2
          %s173 = scalar_select %p172, %s14, 2
          %s174 = smul.addr %s173, 8
          %s175 = scalar_lea.vmem %s0, %s174
        $region28: #{tpu_custom_call.1} parent=23 // pred_fallthru
          _
        // Predicated region
        $region29: #{tpu_custom_call.1} parent=23 // pred_check
          %p176 = pneg %p60
        $region30: #{tpu_custom_call.1} parent=23 // pred_check_branch
          %178 = sbr.rel (%p176) target = $region32
        $region31: #{tpu_custom_call.1} parent=23 // pred_region
          %p179 = scmp.lt.s32.totalorder %s14, 2
          %s180 = scalar_select %p179, %s14, 2
          %s181 = smul.addr %s180, 8
          %s182 = scalar_lea.vmem %s1, %s181
        $region32: #{tpu_custom_call.1} parent=23 // pred_fallthru
          _
      $region24: #{tpu_custom_call.1} parent=5 // pred_fallthru
        _
      %p183 = scmp.le.s32.totalorder 1, %s14
      %p184 = scmp.lt.s32.totalorder %s14, 4
      %p185 = pnand %p183, %p184
      %p186 = pneg %p185
      // Predicated region
      $region33: #{tpu_custom_call.1} parent=5 // pred_check
        _
      $region34: #{tpu_custom_call.1} parent=5 // pred_check_branch
        %188 = sbr.rel (%p185) target = $region36
      $region35: #{tpu_custom_call.1} parent=5 // pred_region
        %s189 = ssub.s32 %s14, 1
        // Predicated region
        $region37: #{tpu_custom_call.1} parent=35 // pred_check
          %p190 = pneg %p87
        $region38: #{tpu_custom_call.1} parent=35 // pred_check_branch
          %192 = sbr.rel (%p190) target = $region40
        $region39: #{tpu_custom_call.1} parent=35 // pred_region
          %193 = dma.done [#allocation3], 2048
        $region40: #{tpu_custom_call.1} parent=35 // pred_fallthru
          _
        %p194 = scmp.lt.s32.totalorder %s19, 2
        %s195 = scalar_select %p194, %s19, 2
        %s196 = smul.addr %s195, 8
        %s197 = scalar_lea.vmem %s0, %s196
        %p198 = pneg %p40
        %p199 = pneg %p37
        %p200 = scmp.lt.s32.totalorder %s19, 2
        %s201 = scalar_select %p200, %s19, 2
        %s202 = smul.addr %s201, 8
        %s203 = scalar_lea.vmem %s1, %s202
        %p204 = pneg %p66
        %p205 = pneg %p63
        %p206 = pneg %p87
        %p207 = pneg %p84
        %p208 = pneg %p108
        %p209 = pneg %p105
        %p210 = pneg %p134
        %p211 = pneg %p131
        %s212 = sand.u32 %s121, 1
        %s213 = scalar_lea.sflag [#allocation4], %s212
        %s214 = sand.u32 %s121, 1
        %s215 = scalar_lea.vmem [#allocation5], %s214
        %p216 = scmp.lt.s32.totalorder %s19, 2
        %s217 = scalar_select %p216, %s19, 2
        %s218 = smul.addr %s217, 8
        %s219 = scalar_lea.vmem %s0, %s218
        %p220 = scmp.lt.s32.totalorder %s19, 2
        %s221 = scalar_select %p220, %s19, 2
        %s222 = smul.addr %s221, 8
        %s223 = scalar_lea.vmem %s1, %s222
        %v225 = vld [vmem:[%s219] sm:$0xff]
        %v226 = vld [vmem:[%s223] sm:$0xff]
        %v227 = vlaneseq
        %v228 = vand.u32 %v227, 127
        %vm229 = vcmp.lt.s32.totalorder %v228, 32
        %vm230 = vcmp.ge.s32.totalorder %v228, 32
        %vm231 = vcmp.lt.s32.totalorder %v228, 64
        %vm232 = vmand %vm230, %vm231
        %v233 = vsel %vm232, 1, 0
        %vm234 = vcmp.eq.s32.totalorder %v233, 1
        %236 = vset.pattern.permute.xlu0 1
        %237 = vperm.xlu0 %236, %v226
        %v238 = vpop.permute.xlu0 %237
        %v240 = vsel %vm234, %v238, 1.0
        %v241 = vsel %vm229, 1, 0
        %vm242 = vcmp.eq.s32.totalorder %v241, 1
        %243 = vset.pattern.permute.xlu0 0
        %244 = vperm.xlu0 %243, %v226
        %v245 = vpop.permute.xlu0 %244
        %v247 = vsel %vm242, %v245, %v240
        %v248 = vmul.f32 %v247, %v225
        %249 = vrot.lane.b32.xlu0 %v248, 96
        %v250 = vpop.permute.xlu0 %249
        %v251 = vadd.f32 %v248, %v250
        %v252 = vpack.c.bf16 %v248, %v248
        %v253 = vld [vmem:[#allocation2] sm:$0xf]
        %v254 = vld [vmem:[#allocation2 + $0x4] sm:$0xf]
        %v255 = vld [vmem:[#allocation2 + $0x8] sm:$0xf]
        %v256 = vld [vmem:[#allocation2 + $0xc] sm:$0xf]
        %v257 = vld [vmem:[#allocation2 + $0x10] sm:$0xf]
        %v258 = vld [vmem:[#allocation2 + $0x14] sm:$0xf]
        %v259 = vld [vmem:[#allocation2 + $0x18] sm:$0xf]
        %v260 = vld [vmem:[#allocation2 + $0x1c] sm:$0xf]
        %v261 = vld [vmem:[#allocation2 + $0x20] sm:$0xf]
        %v262 = vld [vmem:[#allocation2 + $0x24] sm:$0xf]
        %v263 = vld [vmem:[#allocation2 + $0x28] sm:$0xf]
        %v264 = vld [vmem:[#allocation2 + $0x2c] sm:$0xf]
        %v265 = vld [vmem:[#allocation2 + $0x30] sm:$0xf]
        %v266 = vld [vmem:[#allocation2 + $0x34] sm:$0xf]
        %v267 = vld [vmem:[#allocation2 + $0x38] sm:$0xf]
        %v268 = vld [vmem:[#allocation2 + $0x3c] sm:$0xf]
        %v269 = vld [vmem:[%s3] sm:$0x1]
        %v270 = vlaneseq
        %v271 = vshrl.u32 %v270, 7
        %v272 = vsub.s32 0, %v271
        %v273 = vrot.slane %v269, %v272
        %v290 = vunpack.c.l.b16 %v253
        %v291 = vunpack.c.l.b16 %v254
        %v292 = vunpack.c.l.b16 %v255
        %v293 = vunpack.c.l.b16 %v256
        %v294 = vunpack.c.l.b16 %v257
        %v295 = vunpack.c.l.b16 %v258
        %v296 = vunpack.c.l.b16 %v259
        %v297 = vunpack.c.l.b16 %v260
        %v298 = vunpack.c.l.b16 %v261
        %v299 = vunpack.c.l.b16 %v262
        %v300 = vunpack.c.l.b16 %v263
        %v301 = vunpack.c.l.b16 %v264
        %v302 = vunpack.c.l.b16 %v265
        %v303 = vunpack.c.l.b16 %v266
        %v304 = vunpack.c.l.b16 %v267
        %v305 = vunpack.c.l.b16 %v268
        %v306 = vpack.c.b16 %v291, %v290
        %v307 = vpack.c.b16 %v293, %v292
        %v308 = vpack.c.b16 %v295, %v294
        %v309 = vpack.c.b16 %v297, %v296
        %v310 = vpack.c.b16 %v299, %v298
        %v311 = vpack.c.b16 %v301, %v300
        %v312 = vpack.c.b16 %v303, %v302
        %v313 = vpack.c.b16 %v305, %v304
        %322 = vmatprep.subr.bf16.mxu0 0
        %323 = vmatpush1.bf16.msra.mxu0 %v313
        %324 = vmatprep.subr.bf16.mxu0 0
        %325 = vmatpush1.bf16.msra.mxu0 %v312
        %326 = vmatprep.subr.bf16.mxu0 0
        %327 = vmatpush1.bf16.msra.mxu0 %v311
        %328 = vmatprep.subr.bf16.mxu0 0
        %329 = vmatpush1.bf16.msra.mxu0 %v310
        %330 = vmatprep.subr.bf16.mxu0 0
        %331 = vmatpush1.bf16.msra.mxu0 %v309
        %332 = vmatprep.subr.bf16.mxu0 0
        %333 = vmatpush1.bf16.msra.mxu0 %v308
        %334 = vmatprep.subr.bf16.mxu0 0
        %335 = vmatpush1.bf16.msra.mxu0 %v307
        %336 = vmatprep.subr.bf16.mxu0 0
        %337 = vmatpush1.bf16.msra.mxu0 %v306
        %338 = vmatprep.subr.bf16.mxu0 0
        %339 = vmatpush2.bf16.msra.mxu0 0
        %340 = vmatprep.subr.bf16.mxu0 0
        %341 = vmatpush2.bf16.msra.mxu0 0
        %342 = vmatprep.subr.bf16.mxu0 0
        %343 = vmatpush2.bf16.msra.mxu0 0
        %344 = vmatprep.subr.bf16.mxu0 0
        %345 = vmatpush2.bf16.msra.mxu0 0
        %346 = vmatprep.subr.bf16.mxu0 0
        %347 = vmatpush2.bf16.msra.mxu0 0
        %348 = vmatprep.subr.bf16.mxu0 0
        %349 = vmatpush2.bf16.msra.mxu0 0
        %350 = vmatprep.subr.bf16.mxu0 0
        %351 = vmatpush2.bf16.msra.mxu0 0
        %352 = vmatprep.subr.bf16.mxu0 0
        %353 = vmatpush2.bf16.msra.mxu0 0
        %354 = vmatprep.mubr.bf16.mxu0 0
        %355 = vmatmul.mubr.bf16.gmra.mxu0 %v252
        %v356 = vpop.f32.mrf.mxu0
        %v357 = vadd.f32 %v273, %v356
        %v358 = vpop.f32.mrf.mxu0
        %v359 = vpop.f32.mrf.mxu0
        %v360 = vpop.f32.mrf.mxu0
        %361 = vdwg.mxu0
        %v362 = vmul.f32 %v357, %v357
        %v363 = vmul.f32 %v357, %v362
        %v364 = vmul.f32 %v363, 0.044715
        %v365 = vadd.f32 %v357, %v364
        %v366 = vmul.f32 %v365, 0.7978846
        %v367 = vtanh.pop %v366
        %v368 = vadd.f32 %v367, 1.0
        %v369 = vmul.f32 %v368, 0.5
        %v370 = vmul.f32 %v357, %v369
        %v371 = vpack.c.bf16 %v370, %v370
        %s372 = scalar_lea.vmem [#allocation2], 64
        %v373 = vld [vmem:[%s372] sm:$0xf]
        %v374 = vld [vmem:[%s372 + $0x4] sm:$0xf]
        %v375 = vld [vmem:[%s372 + $0x8] sm:$0xf]
        %v376 = vld [vmem:[%s372 + $0xc] sm:$0xf]
        %v377 = vld [vmem:[%s372 + $0x10] sm:$0xf]
        %v378 = vld [vmem:[%s372 + $0x14] sm:$0xf]
        %v379 = vld [vmem:[%s372 + $0x18] sm:$0xf]
        %v380 = vld [vmem:[%s372 + $0x1c] sm:$0xf]
        %v381 = vld [vmem:[%s372 + $0x20] sm:$0xf]
        %v382 = vld [vmem:[%s372 + $0x24] sm:$0xf]
        %v383 = vld [vmem:[%s372 + $0x28] sm:$0xf]
        %v384 = vld [vmem:[%s372 + $0x2c] sm:$0xf]
        %v385 = vld [vmem:[%s372 + $0x30] sm:$0xf]
        %v386 = vld [vmem:[%s372 + $0x34] sm:$0xf]
        %v387 = vld [vmem:[%s372 + $0x38] sm:$0xf]
        %v388 = vld [vmem:[%s372 + $0x3c] sm:$0xf]
        %v389 = vld [vmem:[%s3 + $0x1] sm:$0x1]
        %v390 = vlaneseq
        %v391 = vshrl.u32 %v390, 7
        %v392 = vsub.s32 0, %v391
        %v393 = vrot.slane %v389, %v392
        %v410 = vunpack.c.l.b16 %v373
        %v411 = vunpack.c.l.b16 %v374
        %v412 = vunpack.c.l.b16 %v375
        %v413 = vunpack.c.l.b16 %v376
        %v414 = vunpack.c.l.b16 %v377
        %v415 = vunpack.c.l.b16 %v378
        %v416 = vunpack.c.l.b16 %v379
        %v417 = vunpack.c.l.b16 %v380
        %v418 = vunpack.c.l.b16 %v381
        %v419 = vunpack.c.l.b16 %v382
        %v420 = vunpack.c.l.b16 %v383
        %v421 = vunpack.c.l.b16 %v384
        %v422 = vunpack.c.l.b16 %v385
        %v423 = vunpack.c.l.b16 %v386
        %v424 = vunpack.c.l.b16 %v387
        %v425 = vunpack.c.l.b16 %v388
        %v426 = vpack.c.b16 %v411, %v410
        %v427 = vpack.c.b16 %v413, %v412
        %v428 = vpack.c.b16 %v415, %v414
        %v429 = vpack.c.b16 %v417, %v416
        %v430 = vpack.c.b16 %v419, %v418
        %v431 = vpack.c.b16 %v421, %v420
        %v432 = vpack.c.b16 %v423, %v422
        %v433 = vpack.c.b16 %v425, %v424
        %442 = vmatprep.subr.bf16.mxu0 0
        %443 = vmatpush1.bf16.msra.mxu0 %v433
        %444 = vmatprep.subr.bf16.mxu0 0
        %445 = vmatpush1.bf16.msra.mxu0 %v432
        %446 = vmatprep.subr.bf16.mxu0 0
        %447 = vmatpush1.bf16.msra.mxu0 %v431
        %448 = vmatprep.subr.bf16.mxu0 0
        %449 = vmatpush1.bf16.msra.mxu0 %v430
        %450 = vmatprep.subr.bf16.mxu0 0
        %451 = vmatpush1.bf16.msra.mxu0 %v429
        %452 = vmatprep.subr.bf16.mxu0 0
        %453 = vmatpush1.bf16.msra.mxu0 %v428
        %454 = vmatprep.subr.bf16.mxu0 0
        %455 = vmatpush1.bf16.msra.mxu0 %v427
        %456 = vmatprep.subr.bf16.mxu0 0
        %457 = vmatpush1.bf16.msra.mxu0 %v426
        %458 = vmatprep.subr.bf16.mxu0 0
        %459 = vmatpush2.bf16.msra.mxu0 0
        %460 = vmatprep.subr.bf16.mxu0 0
        %461 = vmatpush2.bf16.msra.mxu0 0
        %462 = vmatprep.subr.bf16.mxu0 0
        %463 = vmatpush2.bf16.msra.mxu0 0
        %464 = vmatprep.subr.bf16.mxu0 0
        %465 = vmatpush2.bf16.msra.mxu0 0
        %466 = vmatprep.subr.bf16.mxu0 0
        %467 = vmatpush2.bf16.msra.mxu0 0
        %468 = vmatprep.subr.bf16.mxu0 0
        %469 = vmatpush2.bf16.msra.mxu0 0
        %470 = vmatprep.subr.bf16.mxu0 0
        %471 = vmatpush2.bf16.msra.mxu0 0
        %472 = vmatprep.subr.bf16.mxu0 0
        %473 = vmatpush2.bf16.msra.mxu0 0
        %474 = vmatprep.mubr.bf16.mxu0 0
        %475 = vmatmul.mubr.bf16.gmra.mxu0 %v371
        %v476 = vpop.f32.mrf.mxu0
        %v477 = vadd.f32 %v393, %v476
        %v478 = vpop.f32.mrf.mxu0
        %v479 = vpop.f32.mrf.mxu0
        %v480 = vpop.f32.mrf.mxu0
        %481 = vdwg.mxu0
        %482 = vset.pattern.permute.xlu0 2
        %483 = vperm.xlu0 %482, %v226
        %v484 = vpop.permute.xlu0 %483
        %v486 = vmul.f32 %v484, %v251
        %487 = vset.pattern.permute.xlu0 3
        %488 = vperm.xlu0 %487, %v226
        %v489 = vpop.permute.xlu0 %488
        %v491 = vmul.f32 %v489, %v477
        %v492 = vsub.f32 %v486, %v491
        %v493 = vsub.f32 %v492, %v225
        %v494 = vand.u32 2147483647, %v493
        %v495 = vsel %vm242, %v494, 0.0
        %v496 = vrot.slane %v495, 4
        %v497 = vadd.f32 %v495, %v496
        %v498 = vrot.slane %v497, 2
        %v499 = vadd.f32 %v497, %v498
        %v500 = vrot.slane %v499, 1
        %v501 = vadd.f32 %v499, %v500
        %502 = vst [vmem:[%s215] sm:$0x1] %v501
        %s503 = sand.u32 %s121, 1
        %s504 = scalar_lea.sflag [#allocation4], %s503
        %s505 = sand.u32 %s121, 1
        %s506 = scalar_lea.vmem [#allocation5], %s505
        // Predicated region
        $region41: #{tpu_custom_call.1} parent=35 // pred_check
          %p507 = pneg %p131
        $region42: #{tpu_custom_call.1} parent=35 // pred_check_branch
          %509 = sbr.rel (%p507) target = $region44
        $region43: #{tpu_custom_call.1} parent=35 // pred_region
          %s511 = ssub.s32 16, 16
          %512 = vsyncadd %s504, %s511
          %s513 = smul.addr %s19, 16
          %s514 = scalar_lea.hbm %s4, %s513
          %s516 = sshll.u32 %s506, 4
          %s517 = int_to_ptr.vmem [resolvable:$true] %s516
          %519 = dma.vmem_to_hbm [thread:$0]  %s517, 16, %s514, %s504
        $region44: #{tpu_custom_call.1} parent=35 // pred_fallthru
          _
      $region36: #{tpu_custom_call.1} parent=5 // pred_fallthru
        _
      %p520 = scmp.le.s32.totalorder 2, %s14
      // Predicated region
      $region45: #{tpu_custom_call.1} parent=5 // pred_check
        %p521 = pneg %p520
      $region46: #{tpu_custom_call.1} parent=5 // pred_check_branch
        %523 = sbr.rel (%p521) target = $region48
      $region47: #{tpu_custom_call.1} parent=5 // pred_region
        %s524 = ssub.s32 %s14, 2
        // Predicated region
        $region49: #{tpu_custom_call.1} parent=47 // pred_check
          %p525 = pneg %p137
        $region50: #{tpu_custom_call.1} parent=47 // pred_check_branch
          %527 = sbr.rel (%p525) target = $region52
        $region51: #{tpu_custom_call.1} parent=47 // pred_region
          %s528 = sand.u32 %s122, 1
          %s529 = scalar_lea.sflag [#allocation4], %s528
          %s530 = sand.u32 %s122, 1
          %s531 = scalar_lea.vmem [#allocation5], %s530
          %532 = dma.done %s529, 16
        $region52: #{tpu_custom_call.1} parent=47 // pred_fallthru
          _
      $region48: #{tpu_custom_call.1} parent=5 // pred_fallthru
        _
    $region6: #{tpu_custom_call.1} parent=1 // loop_footer
      %s18 = sadd.s32 1, %s14
    $region7: #{tpu_custom_call.1} parent=1 // loop_footer_branch
      %13 = sbr.rel target = $region3
    $region8: #{tpu_custom_call.1} parent=1 // loop_exit
      _
    %533 = vsyncpa [#allocation3], 1
    %s534 = scalar_lea.sflag [#allocation3], 1
    %535 = vsyncpa %s534, 1
    %536 = vsyncpa [#allocation4], 1
    %s537 = scalar_lea.sflag [#allocation4], 1
    %538 = vsyncpa %s537, 1

</llo_original>
